<compile_context>
chip_gen: v7x
topology: tpu7x:2x2x1
jax: 0.10.0
libtpu: 0.0.40
codegen_flags: <defaults>
</compile_context>

<pallas_src>
import jax
import jax.numpy as jnp
from jax.experimental import pallas as pl
from jax.experimental.pallas import tpu as pltpu


# ---------------------------------------------------------------------------
# Pallas kernel: fused (im2col-matmul conv) + folded-BatchNorm bias + SiLU
# ---------------------------------------------------------------------------
def conv_bn_silu_kernel(patch_ref, w_ref, bias_ref, o_ref):
    # patch_ref : (K, tm)      bf16 im2col columns (lane-dense along output pixels)
    # w_ref     : (C_out, K)   bf16 conv weight with BN scale pre-folded
    # bias_ref  : (C_out, 1)   f32 folded BN bias = beta - mean * gamma/sqrt(var+eps)
    # o_ref     : (C_out, tm)  f32 output tile (lane-dense stores)
    acc = jnp.dot(w_ref[...], patch_ref[...], preferred_element_type=jnp.float32)
    y = acc + bias_ref[...]
    # SiLU: y * sigmoid(y)  (transcendental goes to the EUP slot)
    o_ref[...] = (y * jax.nn.sigmoid(y)).astype(o_ref.dtype)


def mobilevit_embeddings_forward(x_nchw, w_oihw, bn_gamma, bn_beta, bn_mean, bn_var,
                                 *, eps=1e-5, tm_target=1024):
    """x_nchw: (N, 3, H, W) float32. Returns (N, C_out, H_out, W_out) float32."""
    assert tm_target % 128 == 0, "tm_target must be a multiple of 128 (lane width)"
    N, C_in, H, W = x_nchw.shape
    C_out, _, KH, KW = w_oihw.shape
    stride, pad = 2, 1
    Ho = (H + 2 * pad - KH) // stride + 1
    Wo = (W + 2 * pad - KW) // stride + 1
    HoWo = Ho * Wo
    K = C_in * KH * KW

    # ---- glue: im2col directly in (N, K, Ho*Wo) layout ---------------------
    # K ordered (c, kh, kw) to match PyTorch's OIHW weight flattening.
    x_pad = jnp.pad(x_nchw, ((0, 0), (0, 0), (pad, pad), (pad, pad)))
    slabs = [
        x_pad[:, c, kh:kh + stride * Ho:stride, kw:kw + stride * Wo:stride]
        for c in range(C_in) for kh in range(KH) for kw in range(KW)
    ]
    patches = jnp.stack(slabs, axis=1).reshape(N, K, HoWo)  # (N, K, Ho*Wo)

    # Choose lane tile along Ho*Wo; pad to a multiple of tm if needed.
    if HoWo <= tm_target:
        tm = HoWo           # single tile per batch; block == full dim -> always legal
        Mp = HoWo
    else:
        tm = tm_target      # multiple of 128 -> satisfies the (8, 128) constraint
        Mp = pl.cdiv(HoWo, tm) * tm
        if Mp != HoWo:
            patches = jnp.pad(patches, ((0, 0), (0, 0), (0, Mp - HoWo)))

    # bf16 inputs to the MXU; f32 accumulation inside the kernel.
    patches = patches.astype(jnp.bfloat16)

    # Fold BatchNorm (eval mode): scale into the weight, bias stays separate.
    scale = bn_gamma / jnp.sqrt(bn_var + eps)                           # (C_out,)
    bias = (bn_beta - bn_mean * scale).reshape(C_out, 1).astype(jnp.float32)
    w_fused = (w_oihw.reshape(C_out, K) * scale[:, None]).astype(jnp.bfloat16)

    # ---- Pallas call: grid over (batch, spatial tiles) ----------------------
    grid = (N, Mp // tm)
    out = pl.pallas_call(
        conv_bn_silu_kernel,
        out_shape=jax.ShapeDtypeStruct((N, C_out, Mp), jnp.float32),
        grid_spec=pltpu.PrefetchScalarGridSpec(
            num_scalar_prefetch=0,
            grid=grid,
            in_specs=[
                pl.BlockSpec((None, K, tm), lambda n, j: (n, 0, j)),   # patches
                pl.BlockSpec((C_out, K), lambda n, j: (0, 0)),         # fused weight
                pl.BlockSpec((C_out, 1), lambda n, j: (0, 0)),         # folded bias
            ],
            out_specs=pl.BlockSpec((None, C_out, tm), lambda n, j: (n, 0, j)),
        ),
        compiler_params=pltpu.CompilerParams(
            dimension_semantics=("parallel", "parallel")),
    )(patches, w_fused, bias)

    # ---- glue: (N, C_out, Ho*Wo) -> NCHW (pure reshape, no transpose) -------
    out = out[:, :, :HoWo].reshape(N, C_out, Ho, Wo)
    return out


# ---------------------------------------------------------------------------
# Pure-JAX f32 reference (for a silent correctness check)
# ---------------------------------------------------------------------------
def reference_forward(x_nchw, w_oihw, bn_gamma, bn_beta, bn_mean, bn_var, eps=1e-5):
    y = jax.lax.conv_general_dilated(
        x_nchw, w_oihw, window_strides=(2, 2), padding=((1, 1), (1, 1)),
        dimension_numbers=("NCHW", "OIHW", "NCHW"))
    scale = bn_gamma / jnp.sqrt(bn_var + eps)
    bias = bn_beta - bn_mean * scale
    y = y * scale[None, :, None, None] + bias[None, :, None, None]
    return y * jax.nn.sigmoid(y)


if __name__ == "__main__":
    # Small shapes consistent with the module: image_channels forced to 3,
    # hidden_size=32, batch=2, spatial=16 -> output (2, 32, 8, 8).
    N, C_in, H, W = 2, 3, 16, 16
    hidden = 32

    key = jax.random.PRNGKey(0)
    kx, kw, kg, kb, km, kv = jax.random.split(key, 6)

    x = jax.random.normal(kx, (N, C_in, H, W), dtype=jnp.float32)
    # Conv2d weight (O, I, 3, 3), no bias; BN running stats + affine params.
    w = 0.1 * jax.random.normal(kw, (hidden, C_in, 3, 3), dtype=jnp.float32)
    gamma = 1.0 + 0.1 * jax.random.normal(kg, (hidden,), dtype=jnp.float32)
    beta = 0.05 * jax.random.normal(kb, (hidden,), dtype=jnp.float32)
    mean = 0.02 * jax.random.normal(km, (hidden,), dtype=jnp.float32)
    var = jnp.abs(0.5 + 0.1 * jax.random.normal(kv, (hidden,), dtype=jnp.float32))

    out = mobilevit_embeddings_forward(x, w, gamma, beta, mean, var)
    out = jax.block_until_ready(out)

    ref = reference_forward(x, w, gamma, beta, mean, var)
    assert out.shape == (N, hidden, H // 2, W // 2), out.shape
    # Kernel uses bf16 MXU inputs (f32 accumulation); compare against the f32
    # reference with a tolerance covering bf16 input rounding (~1e-2 worst case).
    max_err = float(jnp.max(jnp.abs(out - ref)))
    assert jnp.allclose(out, ref, atol=5e-2, rtol=5e-2), max_err

    print("KERNEL_OK")
</pallas_src>

<mosaic_0001>
module attributes {stable_mosaic.version = 11 : i64} {
  func.func @conv_bn_silu_kernel(%arg0: i32, %arg1: i32, %arg2: memref<1x27x64xbf16, #tpu.memory_space<vmem>>, %arg3: memref<32x27xbf16, #tpu.memory_space<vmem>>, %arg4: memref<32x1xf32, #tpu.memory_space<vmem>>, %arg5: memref<1x32x64xf32, #tpu.memory_space<vmem>>) attributes {dimension_semantics = [#tpu.dimension_semantics<parallel>, #tpu.dimension_semantics<parallel>], iteration_bounds = array<i64: 2, 1>, scalar_prefetch = 0 : i64, scratch_operands = 0 : i64, tpu.core_type = #tpu.core_type<tc>, window_params = [{transform_indices = @transform_0, window_bounds = array<i64: 1, 27, 64>}, {pipeline_mode = #tpu.pipeline_mode<synchronous>, transform_indices = @transform_1, window_bounds = array<i64: 32, 27>}, {pipeline_mode = #tpu.pipeline_mode<synchronous>, transform_indices = @transform_2, window_bounds = array<i64: 32, 1>}, {transform_indices = @transform_3, window_bounds = array<i64: 1, 32, 64>}]} {
    %c0 = arith.constant 0 : index
    %c0_0 = arith.constant 0 : index
    %0 = vector.load %arg3[%c0, %c0_0] : memref<32x27xbf16, #tpu.memory_space<vmem>>, vector<32x27xbf16>
    %c0_1 = arith.constant 0 : index
    %c0_2 = arith.constant 0 : index
    %c0_3 = arith.constant 0 : index
    %1 = vector.load %arg2[%c0_1, %c0_2, %c0_3] : memref<1x27x64xbf16, #tpu.memory_space<vmem>>, vector<1x27x64xbf16>
    %2 = vector.shape_cast %1 : vector<1x27x64xbf16> to vector<27x64xbf16>
    %cst = arith.constant dense<0.000000e+00> : vector<32x64xf32>
    %3 = tpu.matmul %0, %2, %cst {dimension_numbers = #tpu.dot_dimension_numbers<[1], [0], [0], [1], [0, 0, 1, 1], [], []>} : vector<32x27xbf16>, vector<27x64xbf16>, vector<32x64xf32> -> vector<32x64xf32>
    %c0_4 = arith.constant 0 : index
    %c0_5 = arith.constant 0 : index
    %4 = vector.load %arg4[%c0_4, %c0_5] : memref<32x1xf32, #tpu.memory_space<vmem>>, vector<32x1xf32>
    %5 = vector.broadcast %4 : vector<32x1xf32> to vector<32x64xf32>
    %6 = arith.addf %3, %5 : vector<32x64xf32>
    %7 = arith.negf %6 : vector<32x64xf32>
    %8 = math.exp %7 : vector<32x64xf32>
    %cst_6 = arith.constant 1.000000e+00 : f32
    %9 = vector.broadcast %cst_6 : f32 to vector<32x64xf32>
    %10 = arith.addf %9, %8 : vector<32x64xf32>
    %11 = arith.divf %9, %10 : vector<32x64xf32>
    %12 = arith.mulf %6, %11 : vector<32x64xf32>
    %c0_7 = arith.constant 0 : index
    %c0_8 = arith.constant 0 : index
    %c0_9 = arith.constant 0 : index
    %13 = vector.load %arg5[%c0_7, %c0_8, %c0_9] : memref<1x32x64xf32, #tpu.memory_space<vmem>>, vector<1x32x64xf32>
    %14 = vector.shape_cast %13 : vector<1x32x64xf32> to vector<32x64xf32>
    %15 = vector.shape_cast %12 : vector<32x64xf32> to vector<1x32x64xf32>
    tpu.vector_store %arg5[%c0_7, %c0_8, %c0_9], %15 {strides = array<i32>} : memref<1x32x64xf32, #tpu.memory_space<vmem>>, vector<1x32x64xf32>,
    return
  }
  func.func @transform_0(%arg0: i32, %arg1: i32) -> (i32, i32, i32) {
    %c0_i32 = arith.constant 0 : i32
    %c0_i32_0 = arith.constant 0 : i32
    return %arg0, %c0_i32, %arg1 : i32, i32, i32
  }
  func.func @transform_1(%arg0: i32, %arg1: i32) -> (i32, i32) {
    %c0_i32 = arith.constant 0 : i32
    %c0_i32_0 = arith.constant 0 : i32
    %c0_i32_1 = arith.constant 0 : i32
    return %c0_i32, %c0_i32_0 : i32, i32
  }
  func.func @transform_2(%arg0: i32, %arg1: i32) -> (i32, i32) {
    %c0_i32 = arith.constant 0 : i32
    %c0_i32_0 = arith.constant 0 : i32
    %c0_i32_1 = arith.constant 0 : i32
    return %c0_i32, %c0_i32_0 : i32, i32
  }
  func.func @transform_3(%arg0: i32, %arg1: i32) -> (i32, i32, i32) {
    %c0_i32 = arith.constant 0 : i32
    %c0_i32_0 = arith.constant 0 : i32
    return %arg0, %c0_i32, %arg1 : i32, i32, i32
  }
}

</mosaic_0001>

<llo_original>
// kernel: tpu_custom_call.1
$region0: #{tpu_custom_call.1}
  #allocation0 [shape = 'u32[]', space=smem, size = 0x4, offset = 0x4, fixed_abs, tag = 'smem constant byte address 0x4 - core index']
  #allocation1 [shape = 'u32[144,128]{1,0:T(1,128)}', space=vmem, size = 0x12000, scoped, tag = 'internal scratch']
  %s0 = inlined_call_operand.vmem [shape: bf16[2,27,64], index: 0, kind: input, shape index: {}]
  %s1 = inlined_call_operand.vmem [shape: bf16[32,27], index: 1, kind: input, shape index: {}]
  %s2 = inlined_call_operand.vmem [shape: f32[32,1], index: 2, kind: input, shape index: {}]
  %s3 = inlined_call_operand.hbm [shape: f32[2,32,64], index: 3, kind: output, shape index: {}]
  %s4 = sld [smem:[#allocation0]]
  $region45: #{tpu_custom_call.1} parent=0
    _
  %s6 = ssub.s32 1, %s4
  %s7 = scalar_select 0, %s6, %s4
  $region1: #{tpu_custom_call.1} parent=0
    #allocation2 [shape = 'u8[32768]{0}', space=vmem, size = 0x8000, scoped, tag = 'output window, operand 0']
    #allocation3 [shape = 's32[2]{0}', space=sflag, size = 0x8, scoped, tag = 'scoped memory for tpu_custom_call.1']
    %8 = vsyncpa [#allocation3], 0
    %s9 = scalar_lea.sflag [#allocation3], 1
    %10 = vsyncpa %s9, 0
    loop: start=0, step=1, limit=4
    $region2: #{tpu_custom_call.1} parent=1 // loop_pre_header
      _
    $region3: #{tpu_custom_call.1} parent=1 // loop_header
      %s12 = sphi 0, %s16
      %p13 = scmp.ge.s32.totalorder %s12, 4
      %s19 = sphi 0, %s31
      %s20 = sphi 0, %s27
      %s21 = sphi 0, %s19
      %s22 = sphi 0, %s20
      %s23 = sphi 0, %s21
      %s24 = sphi 0, %s22
      %s36 = sphi 0, %s38
      %s39 = sphi 0, %s36
      %s40 = sphi 0, %s39
      %s56 = sphi 0, %s40
      %s60 = sphi 0, %s60
      %s62 = sphi 0, %s60
      %s63 = sphi 0, %s62
      %s77 = sphi 0, %s63
      %s81 = sphi 0, %s81
      %s83 = sphi 0, %s81
      %s84 = sphi 0, %s83
      %s98 = sphi 0, %s84
      %s106 = sphi 0, %s108
      %s109 = sphi 0, %s106
      %s110 = sphi 0, %s109
      %s126 = sphi 0, %s110
    $region4: #{tpu_custom_call.1} parent=1 // loop_header_branch
      %15 = sbr.rel (%p13) target = $region8
    $region5: #{tpu_custom_call.1} parent=1 // loop_body
      %s17 = ssub.s32 %s12, 1
      %s18 = ssub.s32 %s12, 2
      %s25 = sadd.s32 1, %s20
      %p26 = scmp.ge.s32.totalorder %s25, 1
      %s27 = scalar_select %p26, 0, %s25
      %s28 = sadd.s32 1, %s19
      %s29 = scalar_select %p26, %s28, %s19
      %p30 = scmp.ge.s32.totalorder %s29, 2
      %s31 = scalar_select %p30, 0, %s29
      %s32 = ssub.s32 %s19, %s31
      %s33 = ssub.s32 %s20, %s27
      %s34 = sor.u32 %s32, %s33
      %p35 = scmp.eq.s32.totalorder %s34, 0
      %s37 = sadd.s32 %s36, 1
      %s38 = scalar_select %p35, %s36, %s37
      %p41 = pneg %p35
      %p42 = scmp.eq.s32.totalorder %s12, 1
      %p43 = por %p41, %p42
      %p44 = scmp.ne.s32.totalorder %s36, %s39
      %p45 = scmp.eq.s32.totalorder %s12, 0
      %p46 = por %p44, %p45
      %p47 = scmp.ne.s32.totalorder %s36, %s39
      %p48 = scmp.eq.s32.totalorder %s17, 1
      %p49 = por %p47, %p48
      %p50 = scmp.ne.s32.totalorder %s39, %s40
      %p51 = scmp.eq.s32.totalorder %s17, 0
      %p52 = por %p50, %p51
      %p53 = scmp.ne.s32.totalorder %s39, %s40
      %p54 = scmp.eq.s32.totalorder %s18, 1
      %p55 = por %p53, %p54
      %p57 = scmp.ne.s32.totalorder %s40, %s56
      %p58 = scmp.eq.s32.totalorder %s18, 0
      %p59 = por %p57, %p58
      %s61 = sadd.s32 %s60, 1
      %p64 = scmp.eq.s32.totalorder %s12, 1
      %p65 = scmp.ne.s32.totalorder %s60, %s62
      %p66 = scmp.eq.s32.totalorder %s12, 0
      %p67 = por %p65, %p66
      %p68 = scmp.ne.s32.totalorder %s60, %s62
      %p69 = scmp.eq.s32.totalorder %s17, 1
      %p70 = por %p68, %p69
      %p71 = scmp.ne.s32.totalorder %s62, %s63
      %p72 = scmp.eq.s32.totalorder %s17, 0
      %p73 = por %p71, %p72
      %p74 = scmp.ne.s32.totalorder %s62, %s63
      %p75 = scmp.eq.s32.totalorder %s18, 1
      %p76 = por %p74, %p75
      %p78 = scmp.ne.s32.totalorder %s63, %s77
      %p79 = scmp.eq.s32.totalorder %s18, 0
      %p80 = por %p78, %p79
      %s82 = sadd.s32 %s81, 1
      %p85 = scmp.eq.s32.totalorder %s12, 1
      %p86 = scmp.ne.s32.totalorder %s81, %s83
      %p87 = scmp.eq.s32.totalorder %s12, 0
      %p88 = por %p86, %p87
      %p89 = scmp.ne.s32.totalorder %s81, %s83
      %p90 = scmp.eq.s32.totalorder %s17, 1
      %p91 = por %p89, %p90
      %p92 = scmp.ne.s32.totalorder %s83, %s84
      %p93 = scmp.eq.s32.totalorder %s17, 0
      %p94 = por %p92, %p93
      %p95 = scmp.ne.s32.totalorder %s83, %s84
      %p96 = scmp.eq.s32.totalorder %s18, 1
      %p97 = por %p95, %p96
      %p99 = scmp.ne.s32.totalorder %s84, %s98
      %p100 = scmp.eq.s32.totalorder %s18, 0
      %p101 = por %p99, %p100
      %s102 = ssub.s32 %s19, %s31
      %s103 = ssub.s32 %s20, %s27
      %s104 = sor.u32 %s102, %s103
      %p105 = scmp.eq.s32.totalorder %s104, 0
      %s107 = sadd.s32 %s106, 1
      %s108 = scalar_select %p105, %s106, %s107
      %p111 = pneg %p105
      %p112 = scmp.eq.s32.totalorder %s12, 1
      %p113 = por %p111, %p112
      %p114 = scmp.ne.s32.totalorder %s106, %s109
      %p115 = scmp.eq.s32.totalorder %s12, 0
      %p116 = por %p114, %p115
      %p117 = scmp.ne.s32.totalorder %s106, %s109
      %p118 = scmp.eq.s32.totalorder %s17, 1
      %p119 = por %p117, %p118
      %p120 = scmp.ne.s32.totalorder %s109, %s110
      %p121 = scmp.eq.s32.totalorder %s17, 0
      %p122 = por %p120, %p121
      %p123 = scmp.ne.s32.totalorder %s109, %s110
      %p124 = scmp.eq.s32.totalorder %s18, 1
      %p125 = por %p123, %p124
      %p127 = scmp.ne.s32.totalorder %s110, %s126
      %p128 = scmp.eq.s32.totalorder %s18, 0
      %p129 = por %p127, %p128
      %p130 = scmp.le.s32.totalorder 1, %s12
      %p131 = scmp.lt.s32.totalorder %s12, 3
      %p132 = pnand %p130, %p131
      %p133 = pneg %p132
      // Predicated region
      $region9: #{tpu_custom_call.1} parent=5 // pred_check
        _
      $region10: #{tpu_custom_call.1} parent=5 // pred_check_branch
        %135 = sbr.rel (%p132) target = $region12
      $region11: #{tpu_custom_call.1} parent=5 // pred_region
        %s136 = ssub.s32 %s12, 1
        // Predicated region
        $region13: #{tpu_custom_call.1} parent=11 // pred_check
          %p137 = pneg %p73
        $region14: #{tpu_custom_call.1} parent=11 // pred_check_branch
          %139 = sbr.rel (%p137) target = $region16
        $region15: #{tpu_custom_call.1} parent=11 // pred_region
          _
        $region16: #{tpu_custom_call.1} parent=11 // pred_fallthru
          _
        // Predicated region
        $region17: #{tpu_custom_call.1} parent=11 // pred_check
          %p140 = pneg %p94
        $region18: #{tpu_custom_call.1} parent=11 // pred_check_branch
          %142 = sbr.rel (%p140) target = $region20
        $region19: #{tpu_custom_call.1} parent=11 // pred_region
          _
        $region20: #{tpu_custom_call.1} parent=11 // pred_fallthru
          _
      $region12: #{tpu_custom_call.1} parent=5 // pred_fallthru
        _
      %p143 = scmp.lt.s32.totalorder %s12, 2
      // Predicated region
      $region21: #{tpu_custom_call.1} parent=5 // pred_check
        %p144 = pneg %p143
      $region22: #{tpu_custom_call.1} parent=5 // pred_check_branch
        %146 = sbr.rel (%p144) target = $region24
      $region23: #{tpu_custom_call.1} parent=5 // pred_region
        // Predicated region
        $region25: #{tpu_custom_call.1} parent=23 // pred_check
          %p147 = pneg %p46
        $region26: #{tpu_custom_call.1} parent=23 // pred_check_branch
          %149 = sbr.rel (%p147) target = $region28
        $region27: #{tpu_custom_call.1} parent=23 // pred_region
          %p150 = scmp.lt.s32.totalorder %s19, 1
          %s151 = scalar_select %p150, %s19, 1
          %p152 = scmp.lt.s32.totalorder %s20, 0
          %s153 = scalar_select %p152, %s20, 0
          %s154 = smul.addr %s151, 4
          %s155 = sadd.s32 %s153, %s154
          %s156 = smul.addr %s155, 4
          %s157 = scalar_lea.vmem %s0, %s156
        $region28: #{tpu_custom_call.1} parent=23 // pred_fallthru
          _
      $region24: #{tpu_custom_call.1} parent=5 // pred_fallthru
        _
      %p158 = scmp.le.s32.totalorder 1, %s12
      %p159 = scmp.lt.s32.totalorder %s12, 3
      %p160 = pnand %p158, %p159
      %p161 = pneg %p160
      // Predicated region
      $region29: #{tpu_custom_call.1} parent=5 // pred_check
        _
      $region30: #{tpu_custom_call.1} parent=5 // pred_check_branch
        %163 = sbr.rel (%p160) target = $region32
      $region31: #{tpu_custom_call.1} parent=5 // pred_region
        %s164 = ssub.s32 %s12, 1
        %p165 = scmp.lt.s32.totalorder %s21, 1
        %s166 = scalar_select %p165, %s21, 1
        %p167 = scmp.lt.s32.totalorder %s22, 0
        %s168 = scalar_select %p167, %s22, 0
        %s169 = smul.addr %s166, 4
        %s170 = sadd.s32 %s168, %s169
        %s171 = smul.addr %s170, 4
        %s172 = scalar_lea.vmem %s0, %s171
        %p173 = pneg %p52
        %p174 = pneg %p49
        %p175 = pneg %p73
        %p176 = pneg %p70
        %p177 = pneg %p94
        %p178 = pneg %p91
        %p179 = pneg %p122
        %p180 = pneg %p119
        %s181 = sand.u32 %s109, 1
        %s182 = scalar_lea.sflag [#allocation3], %s181
        %s183 = sand.u32 %s109, 1
        %s184 = smul.addr %s183, 32
        %s185 = scalar_lea.vmem [#allocation2], %s184
        %p186 = scmp.lt.s32.totalorder %s21, 1
        %s187 = scalar_select %p186, %s21, 1
        %p188 = scmp.lt.s32.totalorder %s22, 0
        %s189 = scalar_select %p188, %s22, 0
        %s190 = smul.addr %s187, 4
        %s191 = sadd.s32 %s189, %s190
        %s192 = smul.addr %s191, 4
        %s193 = scalar_lea.vmem %s0, %s192
        %v195 = vld [vmem:[%s1] sm:$0xf]
        %v196 = vld [vmem:[%s1 + $0x4] sm:$0xf]
        %v197 = vld [vmem:[%s1 + $0x8] sm:$0xf]
        %v198 = vld [vmem:[%s1 + $0xc] sm:$0xf]
        %v199 = vld [vmem:[%s193] sm:$0xf]
        %v200 = vld [vmem:[%s193 + $0x4] sm:$0xf]
        %v201 = vld [vmem:[%s193 + $0x8] sm:$0xf]
        %v202 = vld [vmem:[%s193 + $0xc] sm:$0x3]
        %v203 = vld [vmem:[%s2] sm:$0xff]
        %v204 = vld [vmem:[%s2 + $0x8] sm:$0xff]
        %v205 = vld [vmem:[%s2 + $0x10] sm:$0xff]
        %v206 = vld [vmem:[%s2 + $0x18] sm:$0xff]
        %208 = vset.pattern.permute.xlu0 0
        %209 = vperm.xlu0 %208, %v203
        %v210 = vpop.permute.xlu0 %209
        %213 = vset.pattern.permute.xlu0 0
        %214 = vperm.xlu0 %213, %v204
        %v215 = vpop.permute.xlu0 %214
        %218 = vset.pattern.permute.xlu0 0
        %219 = vperm.xlu0 %218, %v205
        %v220 = vpop.permute.xlu0 %219
        %223 = vset.pattern.permute.xlu0 0
        %224 = vperm.xlu0 %223, %v206
        %v225 = vpop.permute.xlu0 %224
        %v231 = vunpack.c.l.b16 %v195
        %v232 = vunpack.c.l.b16 %v196
        %v233 = vunpack.c.l.b16 %v197
        %v234 = vunpack.c.l.b16 %v198
        %v235 = vpack.c.b16 %v232, %v231
        %v236 = vpack.c.b16 %v234, %v233
        %v241 = vunpack.c.l.b16 %v199
        %v242 = vunpack.c.l.b16 %v200
        %v243 = vunpack.c.l.b16 %v201
        %v244 = vunpack.c.l.b16 %v202
        %v245 = vpack.c.b16 %v242, %v241
        %v246 = vpack.c.b16 %v244, %v243
        %vm248 = vcmask 220160
        %v250 = vsel %vm248, %v235, 0
        %v253 = vsel %vm248, %v236, 0
        %vm255 = vcmask 1044480
        %vm256 = vcmask 1045504
        %v257 = vsel %vm255, 4294967295, 65535
        %v258 = vsel %vm256, %v257, 0
        %v260 = vand.u32 %v246, %v258
        %262 = vmatprep.subr.bf16.mxu0 0
        %263 = vmatpush1.bf16.msra.mxu0 %v245
        %264 = vmatprep.subr.bf16.mxu0 0
        %265 = vmatpush1.bf16.msra.mxu0 %v260
        %266 = vmatprep.subr.bf16.mxu0 0
        %267 = vmatpush1.bf16.msra.mxu0 0
        %268 = vmatprep.subr.bf16.mxu0 0
        %269 = vmatpush1.bf16.msra.mxu0 0
        %270 = vmatprep.subr.bf16.mxu0 0
        %271 = vmatpush1.bf16.msra.mxu0 0
        %272 = vmatprep.subr.bf16.mxu0 0
        %273 = vmatpush1.bf16.msra.mxu0 0
        %274 = vmatprep.subr.bf16.mxu0 0
        %275 = vmatpush1.bf16.msra.mxu0 0
        %276 = vmatprep.subr.bf16.mxu0 0
        %277 = vmatpush1.bf16.msra.mxu0 0
        %278 = vmatprep.subr.bf16.mxu0 0
        %279 = vmatpush1.bf16.msra.mxu0 0
        %280 = vmatprep.subr.bf16.mxu0 0
        %281 = vmatpush1.bf16.msra.mxu0 0
        %282 = vmatprep.subr.bf16.mxu0 0
        %283 = vmatpush1.bf16.msra.mxu0 0
        %284 = vmatprep.subr.bf16.mxu0 0
        %285 = vmatpush1.bf16.msra.mxu0 0
        %286 = vmatprep.subr.bf16.mxu0 0
        %287 = vmatpush1.bf16.msra.mxu0 0
        %288 = vmatprep.subr.bf16.mxu0 0
        %289 = vmatpush1.bf16.msra.mxu0 0
        %290 = vmatprep.subr.bf16.mxu0 0
        %291 = vmatpush1.bf16.msra.mxu0 0
        %292 = vmatprep.subr.bf16.mxu0 0
        %293 = vmatpush1.bf16.msra.mxu0 0
        %294 = vmatprep.mubr.bf16.mxu0 0
        %295 = vmatmul.mubr.bf16.gmra.mrb[0].mxu0 %v250
        %v296 = vpop.f32.mrb[0].mxu0
        %v297 = vadd.f32 %v210, %v296
        %v298 = vpop.f32.mrb[0].mxu0
        %v299 = vpop.f32.mrb[0].mxu0
        %v300 = vadd.f32 %v215, %v299
        %v301 = vpop.f32.mrb[0].mxu0
        %302 = vmatprep.mubr.bf16.mxu0 0
        %303 = vmatmul.mubr.bf16.gmra.mrb[0].mxu0 %v253
        %v304 = vpop.f32.mrb[0].mxu0
        %v305 = vadd.f32 %v220, %v304
        %v306 = vpop.f32.mrb[0].mxu0
        %v307 = vpop.f32.mrb[0].mxu0
        %v308 = vadd.f32 %v225, %v307
        %v309 = vpop.f32.mrb[0].mxu0
        %310 = vdwg.mxu0
        %v311 = vxor.u32 %v297, 2147483648
        %v312 = vxor.u32 %v300, 2147483648
        %v313 = vxor.u32 %v305, 2147483648
        %v314 = vxor.u32 %v308, 2147483648
        %v315 = vmul.f32 %v311, 1.442695
        %v316 = vpow.pop %v315
        %v317 = vmul.f32 %v312, 1.442695
        %v318 = vpow.pop %v317
        %v319 = vmul.f32 %v313, 1.442695
        %v320 = vpow.pop %v319
        %v321 = vmul.f32 %v314, 1.442695
        %v322 = vpow.pop %v321
        %v323 = vadd.f32 %v316, 1.0
        %v324 = vadd.f32 %v318, 1.0
        %v325 = vadd.f32 %v320, 1.0
        %v326 = vadd.f32 %v322, 1.0
        %v327 = vrcp.pop %v323
        %v328 = vmul.f32 1.0, %v327
        %v329 = vrcp.pop %v324
        %v330 = vmul.f32 1.0, %v329
        %v331 = vrcp.pop %v325
        %v332 = vmul.f32 1.0, %v331
        %v333 = vrcp.pop %v326
        %v334 = vmul.f32 1.0, %v333
        %v335 = vmul.f32 %v297, %v328
        %v336 = vmul.f32 %v300, %v330
        %v337 = vmul.f32 %v305, %v332
        %v338 = vmul.f32 %v308, %v334
        %vm339 = vcmask 523264
        %340 = vst.msk [vmem:[%s185] sm:$0xff] %vm339, %v335
        %341 = vst.msk [vmem:[%s185 + $0x8] sm:$0xff] %vm339, %v336
        %342 = vst.msk [vmem:[%s185 + $0x10] sm:$0xff] %vm339, %v337
        %343 = vst.msk [vmem:[%s185 + $0x18] sm:$0xff] %vm339, %v338
        %s344 = sand.u32 %s109, 1
        %s345 = scalar_lea.sflag [#allocation3], %s344
        %s346 = sand.u32 %s109, 1
        %s347 = smul.addr %s346, 32
        %s348 = scalar_lea.vmem [#allocation2], %s347
        // Predicated region
        $region33: #{tpu_custom_call.1} parent=31 // pred_check
          %p349 = pneg %p119
        $region34: #{tpu_custom_call.1} parent=31 // pred_check_branch
          %351 = sbr.rel (%p349) target = $region36
        $region35: #{tpu_custom_call.1} parent=31 // pred_region
          %s353 = ssub.s32 512, 512
          %354 = vsyncadd %s345, %s353
          %s355 = smul.addr %s21, 4
          %s356 = sadd.s32 %s22, %s355
          %s357 = smul.addr %s356, 128
          %s358 = scalar_lea.hbm %s3, %s357
          %s359 = sshll.u32 %s348, 4
          %s360 = int_to_ptr.vmem [resolvable:$true] %s359
          %365 = dma.vmem_to_hbm [thread:$0]  %s360, 512, %s358, %s345, 128, 128, 8
        $region36: #{tpu_custom_call.1} parent=31 // pred_fallthru
          _
      $region32: #{tpu_custom_call.1} parent=5 // pred_fallthru
        _
      %p366 = scmp.le.s32.totalorder 2, %s12
      // Predicated region
      $region37: #{tpu_custom_call.1} parent=5 // pred_check
        %p367 = pneg %p366
      $region38: #{tpu_custom_call.1} parent=5 // pred_check_branch
        %369 = sbr.rel (%p367) target = $region40
      $region39: #{tpu_custom_call.1} parent=5 // pred_region
        %s370 = ssub.s32 %s12, 2
        // Predicated region
        $region41: #{tpu_custom_call.1} parent=39 // pred_check
          %p371 = pneg %p125
        $region42: #{tpu_custom_call.1} parent=39 // pred_check_branch
          %373 = sbr.rel (%p371) target = $region44
        $region43: #{tpu_custom_call.1} parent=39 // pred_region
          %s374 = sand.u32 %s110, 1
          %s375 = scalar_lea.sflag [#allocation3], %s374
          %s376 = sand.u32 %s110, 1
          %s377 = smul.addr %s376, 32
          %s378 = scalar_lea.vmem [#allocation2], %s377
          %379 = dma.done %s375, 512
        $region44: #{tpu_custom_call.1} parent=39 // pred_fallthru
          _
      $region40: #{tpu_custom_call.1} parent=5 // pred_fallthru
        _
    $region6: #{tpu_custom_call.1} parent=1 // loop_footer
      %s16 = sadd.s32 1, %s12
    $region7: #{tpu_custom_call.1} parent=1 // loop_footer_branch
      %11 = sbr.rel target = $region3
    $region8: #{tpu_custom_call.1} parent=1 // loop_exit
      _
    %380 = vsyncpa [#allocation3], 1
    %s381 = scalar_lea.sflag [#allocation3], 1
    %382 = vsyncpa %s381, 1

</llo_original>
